<compile_context>
chip_gen: v5e
topology: v5e:2x2
jax: 0.10.0
libtpu: 0.0.40
codegen_flags: <defaults>
</compile_context>

<pallas_src>
import jax
import jax.numpy as jnp
from jax import lax
from jax.experimental import pallas as pl
from jax.experimental.pallas import tpu as pltpu

# ---- small config consistent with ModelArgs semantics ----
DIM = 32
N_HEADS = 4
N_KV_HEADS = 2
HEAD_DIM = DIM // N_HEADS              # 8
N_REP = N_HEADS // N_KV_HEADS          # 2
MAX_BATCH = 2
MAX_SEQ = 16
BATCH = 2
START_POS = 7                          # decode position; context = positions [0, START_POS]
SCALE = HEAD_DIM ** -0.5

Q_DIM = N_HEADS * HEAD_DIM             # 32
KV_DIM = N_KV_HEADS * HEAD_DIM         # 16
QKV_DIM = Q_DIM + 2 * KV_DIM           # 64


# ---------------- fused kernel: QKV(+RoPE) -> cache write -> GQA attention -> Wo ----------------
def fused_attn_kernel(sp_ref, x_ref, wqkv_ref, wo_ref, ck_in_ref, cv_in_ref,
                      out_ref, ck_out_ref, cv_out_ref, attn_ref):
    # sp_ref:   SMEM (1,) int32                     current decode position
    # x_ref:    (B, DIM)                            token activations
    # wqkv_ref: (DIM, QKV_DIM)                      fused Wq|Wk|Wv, RoPE folded in (q/k columns)
    # wo_ref:   (Q_DIM, DIM)                        output projection
    # ck/cv:    (MAX_BATCH, MAX_SEQ, KV_DIM)        KV caches (outputs alias inputs)
    # out_ref:  (B, DIM)
    # attn_ref: (B, Q_DIM) VMEM scratch             lane-contiguous per-head attention slab
    sp = sp_ref[0]
    B = x_ref.shape[0]
    s_max = ck_in_ref.shape[1]

    # one fused MXU matmul: q | k | v for the current token (RoPE already applied via weights)
    qkv = jnp.dot(x_ref[...], wqkv_ref[...], preferred_element_type=jnp.float32)   # (B, QKV_DIM)

    # ---- in-place KV-cache update (outputs alias the input cache buffers) ----
    # TODO(synk): at production cache sizes keep the caches in pl.ANY (HBM), DMA only the
    # start_pos slot and stream the context flash-style instead of a full-cache VMEM block.
    ck_out_ref[...] = ck_in_ref[...]
    cv_out_ref[...] = cv_in_ref[...]
    ck_out_ref[0:B, pl.ds(sp, 1), :] = qkv[:, None, Q_DIM:Q_DIM + KV_DIM]
    cv_out_ref[0:B, pl.ds(sp, 1), :] = qkv[:, None, Q_DIM + KV_DIM:QKV_DIM]

    # positions > start_pos are masked out (cache beyond the live context is stale)
    valid = lax.broadcasted_iota(jnp.int32, (N_REP, s_max), 1) <= sp

    # ---- GQA attention, batched over the N_REP query heads of each kv group ----
    for b in range(B):                                   # static unroll, B small
        k_b = ck_out_ref[b]                              # (s_max, KV_DIM), includes new token
        v_b = cv_out_ref[b]
        for g in range(N_KV_HEADS):
            h0 = g * N_REP
            q_g = jnp.concatenate(
                [qkv[b:b + 1, (h0 + r) * HEAD_DIM:(h0 + r + 1) * HEAD_DIM]
                 for r in range(N_REP)], axis=0)                                  # (N_REP, hd)
            k_g = k_b[:, g * HEAD_DIM:(g + 1) * HEAD_DIM]                         # (s_max, hd)
            v_g = v_b[:, g * HEAD_DIM:(g + 1) * HEAD_DIM]
            s_g = lax.dot_general(q_g, k_g, (((1,), (1,)), ((), ())),
                                  preferred_element_type=jnp.float32) * SCALE     # (N_REP, s_max)
            s_g = jnp.where(valid, s_g, -1e30)
            m = jnp.max(s_g, axis=-1, keepdims=True)
            e = jnp.exp(s_g - m)
            p = e / jnp.sum(e, axis=-1, keepdims=True)
            o_g = jnp.dot(p, v_g, preferred_element_type=jnp.float32)             # (N_REP, hd)
            for r in range(N_REP):
                c0 = (h0 + r) * HEAD_DIM
                attn_ref[b:b + 1, c0:c0 + HEAD_DIM] = o_g[r:r + 1, :]

    # ---- output projection straight off the lane-contiguous slab ----
    out_ref[...] = jnp.dot(attn_ref[...], wo_ref[...], preferred_element_type=jnp.float32)


def _fused_attention_call(sp_arr, x2d, wqkv_eff, wo_t, ck3, cv3):
    B = x2d.shape[0]
    vmem = lambda: pl.BlockSpec(memory_space=pltpu.MemorySpace.VMEM)
    return pl.pallas_call(
        fused_attn_kernel,
        out_shape=(jax.ShapeDtypeStruct((B, DIM), jnp.float32),
                   jax.ShapeDtypeStruct(ck3.shape, ck3.dtype),
                   jax.ShapeDtypeStruct(cv3.shape, cv3.dtype)),
        in_specs=[pl.BlockSpec(memory_space=pltpu.MemorySpace.SMEM),   # start_pos scalar
                  vmem(), vmem(), vmem(), vmem(), vmem()],
        out_specs=(vmem(), vmem(), vmem()),
        scratch_shapes=[pltpu.VMEM((B, Q_DIM), jnp.float32)],
        # cache outputs alias cache inputs -> in-place update, no functional full-cache copy
        input_output_aliases={4: 1, 5: 2},
    )(sp_arr, x2d, wqkv_eff, wo_t, ck3, cv3)


# ---------------- wrapper glue ----------------
def _fold_rope_into_qkv(wq, wk, wv, freqs_cos, freqs_sin):
    """Fused (DIM, QKV_DIM) projection with RoPE for the current position folded in.

    rope(x @ W) = x @ (W * cos_row + (W @ P_blockdiag) * sin_row) for seq_len == 1, where
    P swaps/negates interleaved pairs: (xP)[2i] = -x[2i+1], (xP)[2i+1] = x[2i].
    The v columns use cos = 1, sin = 0 (no rotation).
    """
    rope_heads = N_HEADS + N_KV_HEADS
    cos_h = jnp.repeat(freqs_cos[0], 2)                    # (hd,) cos duplicated per pair
    sin_h = jnp.repeat(freqs_sin[0], 2)
    cos_row = jnp.concatenate(
        [jnp.tile(cos_h, rope_heads), jnp.ones((KV_DIM,), jnp.float32)])[None, :]   # (1, QKV_DIM)
    sin_row = jnp.concatenate(
        [jnp.tile(sin_h, rope_heads), jnp.zeros((KV_DIM,), jnp.float32)])[None, :]
    even = jnp.arange(0, HEAD_DIM, 2)
    P = jnp.zeros((HEAD_DIM, HEAD_DIM), jnp.float32)
    P = P.at[even + 1, even].set(-1.0)                     # (xP)[2i]   = -x[2i+1]
    P = P.at[even, even + 1].set(1.0)                      # (xP)[2i+1] =  x[2i]
    rot = jnp.zeros((QKV_DIM, QKV_DIM), jnp.float32)
    rot = rot.at[:rope_heads * HEAD_DIM, :rope_heads * HEAD_DIM].set(
        jnp.kron(jnp.eye(rope_heads, dtype=jnp.float32), P))
    wqkv = jnp.concatenate([wq.T, wk.T, wv.T], axis=1)     # (DIM, QKV_DIM)
    return wqkv * cos_row + (wqkv @ rot) * sin_row


def self_attention_forward(x, start_pos, freqs_cos, freqs_sin,
                           wq, wk, wv, wo, cache_k, cache_v):
    B, seq_len, dim = x.shape
    assert seq_len == 1, "Only one token can be processed at a time"
    # TODO(synk): the source module's cache write slice (`:start_pos:start_pos+seq_len`) is a
    # typo that can't run as written; implemented the intended Llama decode semantics: write the
    # new k/v at start_pos and attend over positions [0, start_pos].
    wqkv_eff = _fold_rope_into_qkv(wq, wk, wv, freqs_cos, freqs_sin)
    sp_arr = jnp.asarray(start_pos, jnp.int32).reshape(1)
    mb, ms, kvh, hd = cache_k.shape
    # free reshape (merge trailing axes) so the kernel sees a lane-dense (mb, ms, kv*hd) cache
    ck3 = cache_k.reshape(mb, ms, kvh * hd)
    cv3 = cache_v.reshape(mb, ms, kvh * hd)
    out2d, new_ck3, new_cv3 = _fused_attention_call(
        sp_arr, x.reshape(B, dim), wqkv_eff, wo.T, ck3, cv3)
    return (out2d.reshape(B, 1, dim),
            new_ck3.reshape(mb, ms, kvh, hd),
            new_cv3.reshape(mb, ms, kvh, hd))


# jitted entry point: donating the caches lets XLA honor the kernel's in-place cache aliasing
fused_self_attention = jax.jit(self_attention_forward, donate_argnums=(8, 9))


# ---------------- pure-JAX reference (mirrors the PyTorch forward) ----------------
def reference_forward(x, start_pos, freqs_cos, freqs_sin, wq, wk, wv, wo, cache_k, cache_v):
    B, s_len, _ = x.shape
    xq = (x @ wq.T).reshape(B, s_len, N_HEADS, HEAD_DIM)
    xk = (x @ wk.T).reshape(B, s_len, N_KV_HEADS, HEAD_DIM)
    xv = (x @ wv.T).reshape(B, s_len, N_KV_HEADS, HEAD_DIM)

    def rope(t):
        tr = t.reshape(*t.shape[:-1], HEAD_DIM // 2, 2)
        re, im = tr[..., 0], tr[..., 1]
        c = freqs_cos[None, :, None, :]
        s = freqs_sin[None, :, None, :]
        out = jnp.stack([re * c - im * s, re * s + im * c], axis=-1)
        return out.reshape(t.shape)

    xq, xk = rope(xq), rope(xk)
    ck = cache_k.at[:B, start_pos:start_pos + s_len].set(xk)
    cv = cache_v.at[:B, start_pos:start_pos + s_len].set(xv)
    k = jnp.repeat(ck[:B, :start_pos + s_len], N_REP, axis=2)
    v = jnp.repeat(cv[:B, :start_pos + s_len], N_REP, axis=2)
    q = jnp.transpose(xq, (0, 2, 1, 3))
    kt = jnp.transpose(k, (0, 2, 1, 3))
    vt = jnp.transpose(v, (0, 2, 1, 3))
    attn = (q @ jnp.swapaxes(kt, -2, -1)) * SCALE
    attn = jax.nn.softmax(attn, axis=-1)
    o = attn @ vt
    o = jnp.transpose(o, (0, 2, 1, 3)).reshape(B, s_len, -1)
    return o @ wo.T, ck, cv


if __name__ == "__main__":
    key = jax.random.PRNGKey(0)
    k0, k1, k2, k3, k4, k5, k6 = jax.random.split(key, 7)

    x = jax.random.normal(k0, (BATCH, 1, DIM), dtype=jnp.float32)
    wq = jax.random.normal(k1, (N_HEADS * HEAD_DIM, DIM), dtype=jnp.float32) * 0.08
    wk = jax.random.normal(k2, (N_KV_HEADS * HEAD_DIM, DIM), dtype=jnp.float32) * 0.08
    wv = jax.random.normal(k3, (N_KV_HEADS * HEAD_DIM, DIM), dtype=jnp.float32) * 0.08
    wo = jax.random.normal(k4, (DIM, N_HEADS * HEAD_DIM), dtype=jnp.float32) * 0.08
    # cache filled with deterministic values (simulates previously cached decode steps)
    cache_k = jax.random.normal(k5, (MAX_BATCH, MAX_SEQ, N_KV_HEADS, HEAD_DIM),
                                dtype=jnp.float32) * 0.5
    cache_v = jax.random.normal(k6, (MAX_BATCH, MAX_SEQ, N_KV_HEADS, HEAD_DIM),
                                dtype=jnp.float32) * 0.5

    # rotary frequencies for the current position (seq_len == 1)
    inv_freq = 1.0 / (10000.0 ** (jnp.arange(0, HEAD_DIM, 2, dtype=jnp.float32) / HEAD_DIM))
    angles = START_POS * inv_freq
    freqs_cos = jnp.cos(angles)[None, :]          # (1, hd//2)
    freqs_sin = jnp.sin(angles)[None, :]

    # reference FIRST (the kernel call donates the cache buffers)
    ref_out, ref_ck, ref_cv = reference_forward(
        x, START_POS, freqs_cos, freqs_sin, wq, wk, wv, wo, cache_k, cache_v)

    out, new_ck, new_cv = fused_self_attention(
        x, START_POS, freqs_cos, freqs_sin, wq, wk, wv, wo, cache_k, cache_v)
    jax.block_until_ready((out, new_ck, new_cv))

    assert out.shape == (BATCH, 1, DIM)
    assert jnp.allclose(out, ref_out, atol=1e-4, rtol=1e-4), "output mismatch vs JAX reference"
    assert jnp.allclose(new_ck, ref_ck, atol=1e-4, rtol=1e-4), "k-cache mismatch vs JAX reference"
    assert jnp.allclose(new_cv, ref_cv, atol=1e-4, rtol=1e-4), "v-cache mismatch vs JAX reference"
    print("KERNEL_OK")
</pallas_src>

<mosaic_0001>
module attributes {stable_mosaic.version = 11 : i64} {
  func.func @fused_attn_kernel(%arg0: memref<1xi32, #tpu.memory_space<smem>>, %arg1: memref<2x32xf32, #tpu.memory_space<vmem>>, %arg2: memref<32x64xf32, #tpu.memory_space<vmem>>, %arg3: memref<32x32xf32, #tpu.memory_space<vmem>>, %arg4: memref<2x16x16xf32, #tpu.memory_space<vmem>>, %arg5: memref<2x16x16xf32, #tpu.memory_space<vmem>>, %arg6: memref<2x32xf32, #tpu.memory_space<vmem>>, %arg7: memref<2x16x16xf32, #tpu.memory_space<vmem>>, %arg8: memref<2x16x16xf32, #tpu.memory_space<vmem>>, %arg9: memref<2x32xf32, #tpu.memory_space<vmem>>) attributes {dimension_semantics = [], scalar_prefetch = 0 : i64, scratch_operands = 1 : i64, tpu.core_type = #tpu.core_type<tc>} {
    %c0 = arith.constant 0 : index
    %0 = memref.load %arg0[%c0] : memref<1xi32, #tpu.memory_space<smem>>
    %c0_0 = arith.constant 0 : index
    %c0_1 = arith.constant 0 : index
    %1 = vector.load %arg1[%c0_0, %c0_1] : memref<2x32xf32, #tpu.memory_space<vmem>>, vector<2x32xf32>
    %c0_2 = arith.constant 0 : index
    %c0_3 = arith.constant 0 : index
    %2 = vector.load %arg2[%c0_2, %c0_3] : memref<32x64xf32, #tpu.memory_space<vmem>>, vector<32x64xf32>
    %cst = arith.constant dense<0.000000e+00> : vector<2x64xf32>
    %3 = tpu.matmul %1, %2, %cst {dimension_numbers = #tpu.dot_dimension_numbers<[1], [0], [0], [1], [0, 0, 1, 1], [], []>} : vector<2x32xf32>, vector<32x64xf32>, vector<2x64xf32> -> vector<2x64xf32>
    %c0_4 = arith.constant 0 : index
    %c0_5 = arith.constant 0 : index
    %c0_6 = arith.constant 0 : index
    %4 = vector.load %arg4[%c0_4, %c0_5, %c0_6] : memref<2x16x16xf32, #tpu.memory_space<vmem>>, vector<2x16x16xf32>
    %c0_7 = arith.constant 0 : index
    %c0_8 = arith.constant 0 : index
    %c0_9 = arith.constant 0 : index
    %5 = vector.load %arg7[%c0_7, %c0_8, %c0_9] : memref<2x16x16xf32, #tpu.memory_space<vmem>>, vector<2x16x16xf32>
    tpu.vector_store %arg7[%c0_7, %c0_8, %c0_9], %4 {strides = array<i32>} : memref<2x16x16xf32, #tpu.memory_space<vmem>>, vector<2x16x16xf32>,
    %c0_10 = arith.constant 0 : index
    %c0_11 = arith.constant 0 : index
    %c0_12 = arith.constant 0 : index
    %6 = vector.load %arg5[%c0_10, %c0_11, %c0_12] : memref<2x16x16xf32, #tpu.memory_space<vmem>>, vector<2x16x16xf32>
    %c0_13 = arith.constant 0 : index
    %c0_14 = arith.constant 0 : index
    %c0_15 = arith.constant 0 : index
    %7 = vector.load %arg8[%c0_13, %c0_14, %c0_15] : memref<2x16x16xf32, #tpu.memory_space<vmem>>, vector<2x16x16xf32>
    tpu.vector_store %arg8[%c0_13, %c0_14, %c0_15], %6 {strides = array<i32>} : memref<2x16x16xf32, #tpu.memory_space<vmem>>, vector<2x16x16xf32>,
    %8 = vector.extract_strided_slice %3 {offsets = [0, 32], sizes = [2, 16], strides = [1, 1]} : vector<2x64xf32> to vector<2x16xf32>
    %9 = vector.shape_cast %8 : vector<2x16xf32> to vector<2x1x16xf32>
    %c0_16 = arith.constant 0 : index
    %10 = arith.index_cast %0 : i32 to index
    %c0_17 = arith.constant 0 : index
    %11 = vector.load %arg7[%c0_16, %10, %c0_17] : memref<2x16x16xf32, #tpu.memory_space<vmem>>, vector<2x1x16xf32>
    tpu.vector_store %arg7[%c0_16, %10, %c0_17], %9 {strides = array<i32>} : memref<2x16x16xf32, #tpu.memory_space<vmem>>, vector<2x1x16xf32>,
    %12 = vector.extract_strided_slice %3 {offsets = [0, 48], sizes = [2, 16], strides = [1, 1]} : vector<2x64xf32> to vector<2x16xf32>
    %13 = vector.shape_cast %12 : vector<2x16xf32> to vector<2x1x16xf32>
    %c0_18 = arith.constant 0 : index
    %14 = arith.index_cast %0 : i32 to index
    %c0_19 = arith.constant 0 : index
    %15 = vector.load %arg8[%c0_18, %14, %c0_19] : memref<2x16x16xf32, #tpu.memory_space<vmem>>, vector<2x1x16xf32>
    tpu.vector_store %arg8[%c0_18, %14, %c0_19], %13 {strides = array<i32>} : memref<2x16x16xf32, #tpu.memory_space<vmem>>, vector<2x1x16xf32>,
    %16 = tpu.iota {dimensions = array<i32: 1>} : vector<2x16xi32>
    %17 = vector.broadcast %0 : i32 to vector<2x16xi32>
    %18 = arith.cmpi sle, %16, %17 : vector<2x16xi32>
    %c0_20 = arith.constant 0 : index
    %c0_21 = arith.constant 0 : index
    %c0_22 = arith.constant 0 : index
    %19 = vector.load %arg7[%c0_20, %c0_21, %c0_22] : memref<2x16x16xf32, #tpu.memory_space<vmem>>, vector<1x16x16xf32>
    %20 = vector.shape_cast %19 : vector<1x16x16xf32> to vector<16x16xf32>
    %c0_23 = arith.constant 0 : index
    %c0_24 = arith.constant 0 : index
    %c0_25 = arith.constant 0 : index
    %21 = vector.load %arg8[%c0_23, %c0_24, %c0_25] : memref<2x16x16xf32, #tpu.memory_space<vmem>>, vector<1x16x16xf32>
    %22 = vector.shape_cast %21 : vector<1x16x16xf32> to vector<16x16xf32>
    %23 = vector.extract_strided_slice %3 {offsets = [0, 0], sizes = [1, 8], strides = [1, 1]} : vector<2x64xf32> to vector<1x8xf32>
    %24 = vector.extract_strided_slice %3 {offsets = [0, 8], sizes = [1, 8], strides = [1, 1]} : vector<2x64xf32> to vector<1x8xf32>
    %25 = tpu.concatenate %23, %24 in 0 : vector<1x8xf32>, vector<1x8xf32> -> vector<2x8xf32>
    %26 = vector.extract_strided_slice %20 {offsets = [0, 0], sizes = [16, 8], strides = [1, 1]} : vector<16x16xf32> to vector<16x8xf32>
    %27 = vector.extract_strided_slice %22 {offsets = [0, 0], sizes = [16, 8], strides = [1, 1]} : vector<16x16xf32> to vector<16x8xf32>
    %cst_26 = arith.constant dense<0.000000e+00> : vector<2x16xf32>
    %28 = tpu.matmul %25, %26, %cst_26 {dimension_numbers = #tpu.dot_dimension_numbers<[1], [1], [0], [0], [0, 0, 1, 0], [], []>} : vector<2x8xf32>, vector<16x8xf32>, vector<2x16xf32> -> vector<2x16xf32>
    %cst_27 = arith.constant 0.353553385 : f32
    %29 = vector.broadcast %cst_27 : f32 to vector<2x16xf32>
    %30 = arith.mulf %28, %29 : vector<2x16xf32>
    %cst_28 = arith.constant -1.000000e+30 : f32
    %31 = vector.broadcast %cst_28 : f32 to vector<2x16xf32>
    %32 = arith.select %18, %30, %31 : vector<2x16xi1>, vector<2x16xf32>
    %cst_29 = arith.constant dense<0xFF800000> : vector<2xf32>
    %33 = vector.multi_reduction <maximumf>, %32, %cst_29 [1] : vector<2x16xf32> to vector<2xf32>
    %34 = vector.shape_cast %33 : vector<2xf32> to vector<2x1xf32>
    %35 = vector.broadcast %34 : vector<2x1xf32> to vector<2x16xf32>
    %36 = arith.subf %32, %35 : vector<2x16xf32>
    %37 = math.exp %36 : vector<2x16xf32>
    %cst_30 = arith.constant dense<0.000000e+00> : vector<2xf32>
    %38 = vector.multi_reduction <add>, %37, %cst_30 [1] : vector<2x16xf32> to vector<2xf32>
    %39 = vector.shape_cast %38 : vector<2xf32> to vector<2x1xf32>
    %40 = vector.broadcast %39 : vector<2x1xf32> to vector<2x16xf32>
    %41 = arith.divf %37, %40 : vector<2x16xf32>
    %cst_31 = arith.constant dense<0.000000e+00> : vector<2x8xf32>
    %42 = tpu.matmul %41, %27, %cst_31 {dimension_numbers = #tpu.dot_dimension_numbers<[1], [0], [0], [1], [0, 0, 1, 1], [], []>} : vector<2x16xf32>, vector<16x8xf32>, vector<2x8xf32> -> vector<2x8xf32>
    %43 = vector.extract_strided_slice %42 {offsets = [0, 0], sizes = [1, 8], strides = [1, 1]} : vector<2x8xf32> to vector<1x8xf32>
    %c0_32 = arith.constant 0 : index
    %c0_33 = arith.constant 0 : index
    %44 = vector.load %arg9[%c0_32, %c0_33] : memref<2x32xf32, #tpu.memory_space<vmem>>, vector<1x8xf32>
    tpu.vector_store %arg9[%c0_32, %c0_33], %43 {strides = array<i32>} : memref<2x32xf32, #tpu.memory_space<vmem>>, vector<1x8xf32>,
    %45 = vector.extract_strided_slice %42 {offsets = [1, 0], sizes = [1, 8], strides = [1, 1]} : vector<2x8xf32> to vector<1x8xf32>
    %c0_34 = arith.constant 0 : index
    %c8 = arith.constant 8 : index
    %46 = vector.load %arg9[%c0_34, %c8] : memref<2x32xf32, #tpu.memory_space<vmem>>, vector<1x8xf32>
    tpu.vector_store %arg9[%c0_34, %c8], %45 {strides = array<i32>} : memref<2x32xf32, #tpu.memory_space<vmem>>, vector<1x8xf32>,
    %47 = vector.extract_strided_slice %3 {offsets = [0, 16], sizes = [1, 8], strides = [1, 1]} : vector<2x64xf32> to vector<1x8xf32>
    %48 = vector.extract_strided_slice %3 {offsets = [0, 24], sizes = [1, 8], strides = [1, 1]} : vector<2x64xf32> to vector<1x8xf32>
    %49 = tpu.concatenate %47, %48 in 0 : vector<1x8xf32>, vector<1x8xf32> -> vector<2x8xf32>
    %50 = vector.extract_strided_slice %20 {offsets = [0, 8], sizes = [16, 8], strides = [1, 1]} : vector<16x16xf32> to vector<16x8xf32>
    %51 = vector.extract_strided_slice %22 {offsets = [0, 8], sizes = [16, 8], strides = [1, 1]} : vector<16x16xf32> to vector<16x8xf32>
    %cst_35 = arith.constant dense<0.000000e+00> : vector<2x16xf32>
    %52 = tpu.matmul %49, %50, %cst_35 {dimension_numbers = #tpu.dot_dimension_numbers<[1], [1], [0], [0], [0, 0, 1, 0], [], []>} : vector<2x8xf32>, vector<16x8xf32>, vector<2x16xf32> -> vector<2x16xf32>
    %cst_36 = arith.constant 0.353553385 : f32
    %53 = vector.broadcast %cst_36 : f32 to vector<2x16xf32>
    %54 = arith.mulf %52, %53 : vector<2x16xf32>
    %cst_37 = arith.constant -1.000000e+30 : f32
    %55 = vector.broadcast %cst_37 : f32 to vector<2x16xf32>
    %56 = arith.select %18, %54, %55 : vector<2x16xi1>, vector<2x16xf32>
    %cst_38 = arith.constant dense<0xFF800000> : vector<2xf32>
    %57 = vector.multi_reduction <maximumf>, %56, %cst_38 [1] : vector<2x16xf32> to vector<2xf32>
    %58 = vector.shape_cast %57 : vector<2xf32> to vector<2x1xf32>
    %59 = vector.broadcast %58 : vector<2x1xf32> to vector<2x16xf32>
    %60 = arith.subf %56, %59 : vector<2x16xf32>
    %61 = math.exp %60 : vector<2x16xf32>
    %cst_39 = arith.constant dense<0.000000e+00> : vector<2xf32>
    %62 = vector.multi_reduction <add>, %61, %cst_39 [1] : vector<2x16xf32> to vector<2xf32>
    %63 = vector.shape_cast %62 : vector<2xf32> to vector<2x1xf32>
    %64 = vector.broadcast %63 : vector<2x1xf32> to vector<2x16xf32>
    %65 = arith.divf %61, %64 : vector<2x16xf32>
    %cst_40 = arith.constant dense<0.000000e+00> : vector<2x8xf32>
    %66 = tpu.matmul %65, %51, %cst_40 {dimension_numbers = #tpu.dot_dimension_numbers<[1], [0], [0], [1], [0, 0, 1, 1], [], []>} : vector<2x16xf32>, vector<16x8xf32>, vector<2x8xf32> -> vector<2x8xf32>
    %67 = vector.extract_strided_slice %66 {offsets = [0, 0], sizes = [1, 8], strides = [1, 1]} : vector<2x8xf32> to vector<1x8xf32>
    %c0_41 = arith.constant 0 : index
    %c16 = arith.constant 16 : index
    %68 = vector.load %arg9[%c0_41, %c16] : memref<2x32xf32, #tpu.memory_space<vmem>>, vector<1x8xf32>
    tpu.vector_store %arg9[%c0_41, %c16], %67 {strides = array<i32>} : memref<2x32xf32, #tpu.memory_space<vmem>>, vector<1x8xf32>,
    %69 = vector.extract_strided_slice %66 {offsets = [1, 0], sizes = [1, 8], strides = [1, 1]} : vector<2x8xf32> to vector<1x8xf32>
    %c0_42 = arith.constant 0 : index
    %c24 = arith.constant 24 : index
    %70 = vector.load %arg9[%c0_42, %c24] : memref<2x32xf32, #tpu.memory_space<vmem>>, vector<1x8xf32>
    tpu.vector_store %arg9[%c0_42, %c24], %69 {strides = array<i32>} : memref<2x32xf32, #tpu.memory_space<vmem>>, vector<1x8xf32>,
    %c1 = arith.constant 1 : index
    %c0_43 = arith.constant 0 : index
    %c0_44 = arith.constant 0 : index
    %71 = vector.load %arg7[%c1, %c0_43, %c0_44] : memref<2x16x16xf32, #tpu.memory_space<vmem>>, vector<1x16x16xf32>
    %72 = vector.shape_cast %71 : vector<1x16x16xf32> to vector<16x16xf32>
    %c1_45 = arith.constant 1 : index
    %c0_46 = arith.constant 0 : index
    %c0_47 = arith.constant 0 : index
    %73 = vector.load %arg8[%c1_45, %c0_46, %c0_47] : memref<2x16x16xf32, #tpu.memory_space<vmem>>, vector<1x16x16xf32>
    %74 = vector.shape_cast %73 : vector<1x16x16xf32> to vector<16x16xf32>
    %75 = vector.extract_strided_slice %3 {offsets = [1, 0], sizes = [1, 8], strides = [1, 1]} : vector<2x64xf32> to vector<1x8xf32>
    %76 = vector.extract_strided_slice %3 {offsets = [1, 8], sizes = [1, 8], strides = [1, 1]} : vector<2x64xf32> to vector<1x8xf32>
    %77 = tpu.concatenate %75, %76 in 0 : vector<1x8xf32>, vector<1x8xf32> -> vector<2x8xf32>
    %78 = vector.extract_strided_slice %72 {offsets = [0, 0], sizes = [16, 8], strides = [1, 1]} : vector<16x16xf32> to vector<16x8xf32>
    %79 = vector.extract_strided_slice %74 {offsets = [0, 0], sizes = [16, 8], strides = [1, 1]} : vector<16x16xf32> to vector<16x8xf32>
    %cst_48 = arith.constant dense<0.000000e+00> : vector<2x16xf32>
    %80 = tpu.matmul %77, %78, %cst_48 {dimension_numbers = #tpu.dot_dimension_numbers<[1], [1], [0], [0], [0, 0, 1, 0], [], []>} : vector<2x8xf32>, vector<16x8xf32>, vector<2x16xf32> -> vector<2x16xf32>
    %cst_49 = arith.constant 0.353553385 : f32
    %81 = vector.broadcast %cst_49 : f32 to vector<2x16xf32>
    %82 = arith.mulf %80, %81 : vector<2x16xf32>
    %cst_50 = arith.constant -1.000000e+30 : f32
    %83 = vector.broadcast %cst_50 : f32 to vector<2x16xf32>
    %84 = arith.select %18, %82, %83 : vector<2x16xi1>, vector<2x16xf32>
    %cst_51 = arith.constant dense<0xFF800000> : vector<2xf32>
    %85 = vector.multi_reduction <maximumf>, %84, %cst_51 [1] : vector<2x16xf32> to vector<2xf32>
    %86 = vector.shape_cast %85 : vector<2xf32> to vector<2x1xf32>
    %87 = vector.broadcast %86 : vector<2x1xf32> to vector<2x16xf32>
    %88 = arith.subf %84, %87 : vector<2x16xf32>
    %89 = math.exp %88 : vector<2x16xf32>
    %cst_52 = arith.constant dense<0.000000e+00> : vector<2xf32>
    %90 = vector.multi_reduction <add>, %89, %cst_52 [1] : vector<2x16xf32> to vector<2xf32>
    %91 = vector.shape_cast %90 : vector<2xf32> to vector<2x1xf32>
    %92 = vector.broadcast %91 : vector<2x1xf32> to vector<2x16xf32>
    %93 = arith.divf %89, %92 : vector<2x16xf32>
    %cst_53 = arith.constant dense<0.000000e+00> : vector<2x8xf32>
    %94 = tpu.matmul %93, %79, %cst_53 {dimension_numbers = #tpu.dot_dimension_numbers<[1], [0], [0], [1], [0, 0, 1, 1], [], []>} : vector<2x16xf32>, vector<16x8xf32>, vector<2x8xf32> -> vector<2x8xf32>
    %95 = vector.extract_strided_slice %94 {offsets = [0, 0], sizes = [1, 8], strides = [1, 1]} : vector<2x8xf32> to vector<1x8xf32>
    %c1_54 = arith.constant 1 : index
    %c0_55 = arith.constant 0 : index
    %96 = vector.load %arg9[%c1_54, %c0_55] : memref<2x32xf32, #tpu.memory_space<vmem>>, vector<1x8xf32>
    tpu.vector_store %arg9[%c1_54, %c0_55], %95 {strides = array<i32>} : memref<2x32xf32, #tpu.memory_space<vmem>>, vector<1x8xf32>,
    %97 = vector.extract_strided_slice %94 {offsets = [1, 0], sizes = [1, 8], strides = [1, 1]} : vector<2x8xf32> to vector<1x8xf32>
    %c1_56 = arith.constant 1 : index
    %c8_57 = arith.constant 8 : index
    %98 = vector.load %arg9[%c1_56, %c8_57] : memref<2x32xf32, #tpu.memory_space<vmem>>, vector<1x8xf32>
    tpu.vector_store %arg9[%c1_56, %c8_57], %97 {strides = array<i32>} : memref<2x32xf32, #tpu.memory_space<vmem>>, vector<1x8xf32>,
    %99 = vector.extract_strided_slice %3 {offsets = [1, 16], sizes = [1, 8], strides = [1, 1]} : vector<2x64xf32> to vector<1x8xf32>
    %100 = vector.extract_strided_slice %3 {offsets = [1, 24], sizes = [1, 8], strides = [1, 1]} : vector<2x64xf32> to vector<1x8xf32>
    %101 = tpu.concatenate %99, %100 in 0 : vector<1x8xf32>, vector<1x8xf32> -> vector<2x8xf32>
    %102 = vector.extract_strided_slice %72 {offsets = [0, 8], sizes = [16, 8], strides = [1, 1]} : vector<16x16xf32> to vector<16x8xf32>
    %103 = vector.extract_strided_slice %74 {offsets = [0, 8], sizes = [16, 8], strides = [1, 1]} : vector<16x16xf32> to vector<16x8xf32>
    %cst_58 = arith.constant dense<0.000000e+00> : vector<2x16xf32>
    %104 = tpu.matmul %101, %102, %cst_58 {dimension_numbers = #tpu.dot_dimension_numbers<[1], [1], [0], [0], [0, 0, 1, 0], [], []>} : vector<2x8xf32>, vector<16x8xf32>, vector<2x16xf32> -> vector<2x16xf32>
    %cst_59 = arith.constant 0.353553385 : f32
    %105 = vector.broadcast %cst_59 : f32 to vector<2x16xf32>
    %106 = arith.mulf %104, %105 : vector<2x16xf32>
    %cst_60 = arith.constant -1.000000e+30 : f32
    %107 = vector.broadcast %cst_60 : f32 to vector<2x16xf32>
    %108 = arith.select %18, %106, %107 : vector<2x16xi1>, vector<2x16xf32>
    %cst_61 = arith.constant dense<0xFF800000> : vector<2xf32>
    %109 = vector.multi_reduction <maximumf>, %108, %cst_61 [1] : vector<2x16xf32> to vector<2xf32>
    %110 = vector.shape_cast %109 : vector<2xf32> to vector<2x1xf32>
    %111 = vector.broadcast %110 : vector<2x1xf32> to vector<2x16xf32>
    %112 = arith.subf %108, %111 : vector<2x16xf32>
    %113 = math.exp %112 : vector<2x16xf32>
    %cst_62 = arith.constant dense<0.000000e+00> : vector<2xf32>
    %114 = vector.multi_reduction <add>, %113, %cst_62 [1] : vector<2x16xf32> to vector<2xf32>
    %115 = vector.shape_cast %114 : vector<2xf32> to vector<2x1xf32>
    %116 = vector.broadcast %115 : vector<2x1xf32> to vector<2x16xf32>
    %117 = arith.divf %113, %116 : vector<2x16xf32>
    %cst_63 = arith.constant dense<0.000000e+00> : vector<2x8xf32>
    %118 = tpu.matmul %117, %103, %cst_63 {dimension_numbers = #tpu.dot_dimension_numbers<[1], [0], [0], [1], [0, 0, 1, 1], [], []>} : vector<2x16xf32>, vector<16x8xf32>, vector<2x8xf32> -> vector<2x8xf32>
    %119 = vector.extract_strided_slice %118 {offsets = [0, 0], sizes = [1, 8], strides = [1, 1]} : vector<2x8xf32> to vector<1x8xf32>
    %c1_64 = arith.constant 1 : index
    %c16_65 = arith.constant 16 : index
    %120 = vector.load %arg9[%c1_64, %c16_65] : memref<2x32xf32, #tpu.memory_space<vmem>>, vector<1x8xf32>
    tpu.vector_store %arg9[%c1_64, %c16_65], %119 {strides = array<i32>} : memref<2x32xf32, #tpu.memory_space<vmem>>, vector<1x8xf32>,
    %121 = vector.extract_strided_slice %118 {offsets = [1, 0], sizes = [1, 8], strides = [1, 1]} : vector<2x8xf32> to vector<1x8xf32>
    %c1_66 = arith.constant 1 : index
    %c24_67 = arith.constant 24 : index
    %122 = vector.load %arg9[%c1_66, %c24_67] : memref<2x32xf32, #tpu.memory_space<vmem>>, vector<1x8xf32>
    tpu.vector_store %arg9[%c1_66, %c24_67], %121 {strides = array<i32>} : memref<2x32xf32, #tpu.memory_space<vmem>>, vector<1x8xf32>,
    %c0_68 = arith.constant 0 : index
    %c0_69 = arith.constant 0 : index
    %123 = vector.load %arg9[%c0_68, %c0_69] : memref<2x32xf32, #tpu.memory_space<vmem>>, vector<2x32xf32>
    %c0_70 = arith.constant 0 : index
    %c0_71 = arith.constant 0 : index
    %124 = vector.load %arg3[%c0_70, %c0_71] : memref<32x32xf32, #tpu.memory_space<vmem>>, vector<32x32xf32>
    %cst_72 = arith.constant dense<0.000000e+00> : vector<2x32xf32>
    %125 = tpu.matmul %123, %124, %cst_72 {dimension_numbers = #tpu.dot_dimension_numbers<[1], [0], [0], [1], [0, 0, 1, 1], [], []>} : vector<2x32xf32>, vector<32x32xf32>, vector<2x32xf32> -> vector<2x32xf32>
    %c0_73 = arith.constant 0 : index
    %c0_74 = arith.constant 0 : index
    %126 = vector.load %arg6[%c0_73, %c0_74] : memref<2x32xf32, #tpu.memory_space<vmem>>, vector<2x32xf32>
    tpu.vector_store %arg6[%c0_73, %c0_74], %125 {strides = array<i32>} : memref<2x32xf32, #tpu.memory_space<vmem>>, vector<2x32xf32>,
    return
  }
}

</mosaic_0001>

<llo_original>
// kernel: tile.9
$region0: #{tile.9}
  %s0 = inlined_call_operand.vmem [shape: f32[4,2], index: 0, kind: input, shape index: {}]
  %s1 = inlined_call_operand.vmem [shape: f32[8], index: 1, kind: output, shape index: {}]
  $region1: #{tile.9} parent=0
    #allocation0 [shape = 'u8[4096]{0}', space=vmem, size = 0x1000, scoped, tag = 'scoped mem for output reshape']
    #allocation1 [shape = 'u8[4096]{0}', space=vmem, size = 0x1000, scoped, tag = 'scoped mem for input reshape']
    %s3 = ssub.s32 16, 1
    %v4 = vld [vmem:[%s0] sm:%s3]
    %5 = vst [vmem:[#allocation1] sm:%s3] %v4
    %v6 = vld [vmem:[#allocation1] sm:$0x1]
    %vm7 = vcmask 15360
    %8 = vst.msk [vmem:[#allocation0] sm:$0x1] %vm7, %v6
    %s9 = scalar_lea.vmem [#allocation1], 3
    %v10 = vld [vmem:[%s9] sm:$0x1]
    %11 = vrot.lane.b32.xlu0 %v10, 6
    %v12 = vpop.permute.xlu0 %11
    %vm13 = vcmask 64560
    %14 = vst.msk [vmem:[#allocation0] sm:$0x1] %vm13, %v12
    %s15 = scalar_lea.vmem [#allocation1], 2
    %v16 = vld [vmem:[%s15] sm:$0x1]
    %17 = vrot.lane.b32.xlu0 %v16, 4
    %v18 = vpop.permute.xlu0 %17
    %vm19 = vcmask 48160
    %20 = vst.msk [vmem:[#allocation0] sm:$0x1] %vm19, %v18
    %s21 = scalar_lea.vmem [#allocation1], 1
    %v22 = vld [vmem:[%s21] sm:$0x1]
    %23 = vrot.lane.b32.xlu0 %v22, 2
    %v24 = vpop.permute.xlu0 %23
    %vm25 = vcmask 31760
    %26 = vst.msk [vmem:[#allocation0] sm:$0x1] %vm25, %v24
    %s28 = ssub.s32 2, 1
    %v29 = vld [vmem:[#allocation0] sm:%s28]
    %s31 = ssub.s32 2, 1
    %32 = vst [vmem:[%s1] sm:%s31] %v29

// kernel: tile.10
$region0: #{tile.10}
  #allocation0 [shape = 's32[1]{0}', space=sflag, size = 0x4, scoped, tag = 'scoped memory for tile.10']
  %s0 = inlined_call_operand.vmem [shape: f32[8], index: 0, kind: input, shape index: {}]
  %s1 = inlined_call_operand.vmem [shape: f32[6,8], index: 1, kind: output, shape index: {}]
  // Predicated region
  $region2: #{tile.10} parent=0 // pred_check
    _
  $region3: #{tile.10} parent=0 // pred_check_branch
    %3 = sbr.rel (0) target = $region5
  $region4: #{tile.10} parent=0 // pred_region
    _
  $region5: #{tile.10} parent=0 // pred_fallthru
    _
  %v4 = vld [vmem:[%s0] ss:$0 sm:$0xff]
  %5 = vst [vmem:[%s1] sm:$0xff] %v4

// kernel: tile.11
$region0: #{tile.11}
  %s0 = inlined_call_operand.vmem [shape: f32[6,8], index: 0, kind: input, shape index: {}]
  %s1 = inlined_call_operand.vmem [shape: f32[48], index: 1, kind: output, shape index: {}]
  $region1: #{tile.11} parent=0
    #allocation0 [shape = 'u8[4096]{0}', space=vmem, size = 0x1000, scoped, tag = 'scoped mem for output reshape']
    %v2 = vld [vmem:[%s0] sm:$0x1]
    %vm3 = vcmask 64512
    %4 = vst.msk [vmem:[#allocation0] sm:$0x1] %vm3, %v2
    %s5 = scalar_lea.vmem %s0, 5
    %v6 = vld [vmem:[%s5] sm:$0x1]
    %7 = vrot.lane.b32.xlu0 %v6, 40
    %v8 = vpop.permute.xlu0 %7
    %vm9 = vcmask 392512
    %10 = vst.msk [vmem:[#allocation0] sm:$0x1] %vm9, %v8
    %s11 = scalar_lea.vmem %s0, 4
    %v12 = vld [vmem:[%s11] sm:$0x1]
    %13 = vrot.lane.b32.xlu0 %v12, 32
    %v14 = vpop.permute.xlu0 %13
    %vm15 = vcmask 326912
    %16 = vst.msk [vmem:[#allocation0] sm:$0x1] %vm15, %v14
    %s17 = scalar_lea.vmem %s0, 3
    %v18 = vld [vmem:[%s17] sm:$0x1]
    %19 = vrot.lane.b32.xlu0 %v18, 24
    %v20 = vpop.permute.xlu0 %19
    %vm21 = vcmask 261312
    %22 = vst.msk [vmem:[#allocation0] sm:$0x1] %vm21, %v20
    %s23 = scalar_lea.vmem %s0, 2
    %v24 = vld [vmem:[%s23] sm:$0x1]
    %25 = vrot.lane.b32.xlu0 %v24, 16
    %v26 = vpop.permute.xlu0 %25
    %vm27 = vcmask 195712
    %28 = vst.msk [vmem:[#allocation0] sm:$0x1] %vm27, %v26
    %s29 = scalar_lea.vmem %s0, 1
    %v30 = vld [vmem:[%s29] sm:$0x1]
    %31 = vrot.lane.b32.xlu0 %v30, 8
    %v32 = vpop.permute.xlu0 %31
    %vm33 = vcmask 130112
    %34 = vst.msk [vmem:[#allocation0] sm:$0x1] %vm33, %v32
    %s36 = ssub.s32 2, 1
    %v37 = vld [vmem:[#allocation0] sm:%s36]
    %s39 = ssub.s32 2, 1
    %40 = vst [vmem:[%s1] sm:%s39] %v37

// kernel: self_attention_forward.1
$region0: #{self_attention_forward.1}
  #allocation0 [shape = 'u32[]', space=smem, size = 0x4, offset = 0x4, fixed_abs, tag = 'smem constant byte address 0x4 - core index']
  #allocation1 [shape = 'u32[72,128]{1,0:T(1,128)}', space=vmem, size = 0x9000, scoped, tag = 'internal scratch']
  #allocation2 [shape = 'f32[2,32]{1,0:T(2,128)}', space=vmem, size = 0x400, scoped, tag = 'scratch operand']
  #allocation3 [shape = 's32[1]{0:T(128)S(6)}', space=smem, size = 0x200, scoped, tag = 'scoped memory for self_attention_forward.1']
  %s0 = inlined_call_operand.<no memory space> [shape: s32[1], index: 0, kind: input, shape index: {}]
  %s1 = inlined_call_operand.vmem [shape: f32[2,32], index: 1, kind: input, shape index: {}]
  %s2 = inlined_call_operand.vmem [shape: f32[32,64], index: 2, kind: input, shape index: {}]
  %s3 = inlined_call_operand.vmem [shape: f32[32,32], index: 3, kind: input, shape index: {}]
  %s4 = inlined_call_operand.vmem [shape: f32[2,16,16], index: 4, kind: input, shape index: {}, may-alias: {4,7}]
  %s5 = inlined_call_operand.vmem [shape: f32[2,16,16], index: 5, kind: input, shape index: {}, may-alias: {5,8}]
  %s6 = inlined_call_operand.hbm [shape: f32[2,32], index: 6, kind: output, shape index: {0}]
  %s7 = inlined_call_operand.vmem [shape: f32[2,16,16], index: 7, kind: output, shape index: {1}, may-alias: {4,7}]
  %s8 = inlined_call_operand.vmem [shape: f32[2,16,16], index: 8, kind: output, shape index: {2}, may-alias: {5,8}]
  %9 = xla_tuple %s6, %s7, %s8
  %s10 = sld [smem:[#allocation0]]
  $region50: #{self_attention_forward.1} parent=0
    _
  %s12 = ssub.s32 1, %s10
  %s13 = scalar_select 0, %s12, %s10
  %14 = sst [smem:[#allocation3]] %s0
  $region1: #{self_attention_forward.1} parent=0
    #allocation4 [shape = 'u8[1024]{0}', space=vmem, size = 0x400, scoped, tag = 'output window, operand 0, single buffered']
    #allocation5 [shape = 's32[1]{0}', space=sflag, size = 0x4, scoped, tag = 'scoped memory for self_attention_forward.1']
    %15 = vsyncpa [#allocation5], 0
    // Predicated region
    $region2: #{self_attention_forward.1} parent=1 // pred_check
      _
    $region3: #{self_attention_forward.1} parent=1 // pred_check_branch
      %17 = sbr.rel (0) target = $region5
    $region4: #{self_attention_forward.1} parent=1 // pred_region
      _
    $region5: #{self_attention_forward.1} parent=1 // pred_fallthru
      _
    // Predicated region
    $region6: #{self_attention_forward.1} parent=1 // pred_check
      _
    $region7: #{self_attention_forward.1} parent=1 // pred_check_branch
      %19 = sbr.rel (0) target = $region9
    $region8: #{self_attention_forward.1} parent=1 // pred_region
      _
    $region9: #{self_attention_forward.1} parent=1 // pred_fallthru
      _
    // Predicated region
    $region10: #{self_attention_forward.1} parent=1 // pred_check
      _
    $region11: #{self_attention_forward.1} parent=1 // pred_check_branch
      %21 = sbr.rel (0) target = $region13
    $region12: #{self_attention_forward.1} parent=1 // pred_region
      _
    $region13: #{self_attention_forward.1} parent=1 // pred_fallthru
      _
    // Predicated region
    $region14: #{self_attention_forward.1} parent=1 // pred_check
      _
    $region15: #{self_attention_forward.1} parent=1 // pred_check_branch
      %23 = sbr.rel (0) target = $region17
    $region16: #{self_attention_forward.1} parent=1 // pred_region
      _
    $region17: #{self_attention_forward.1} parent=1 // pred_fallthru
      _
    // Predicated region
    $region18: #{self_attention_forward.1} parent=1 // pred_check
      _
    $region19: #{self_attention_forward.1} parent=1 // pred_check_branch
      %25 = sbr.rel (0) target = $region21
    $region20: #{self_attention_forward.1} parent=1 // pred_region
      _
    $region21: #{self_attention_forward.1} parent=1 // pred_fallthru
      _
    // Predicated region
    $region22: #{self_attention_forward.1} parent=1 // pred_check
      _
    $region23: #{self_attention_forward.1} parent=1 // pred_check_branch
      %27 = sbr.rel (0) target = $region25
    $region24: #{self_attention_forward.1} parent=1 // pred_region
      _
    $region25: #{self_attention_forward.1} parent=1 // pred_fallthru
      _
    %s28 = sld [smem:[#allocation3]]
    %v29 = vld [vmem:[%s1] sm:$0x3]
    %v30 = vld [vmem:[%s2] sm:$0xff]
    %v31 = vld [vmem:[%s2 + $0x8] sm:$0xff]
    %v32 = vld [vmem:[%s2 + $0x10] sm:$0xff]
    %v33 = vld [vmem:[%s2 + $0x18] sm:$0xff]
    %vm34 = vcmask 261120
    %v36 = vsel %vm34, %v29, 0
    %38 = vmatpush.msra.mxu0 0.0
    %39 = vmatpush.msra.mxu0 0.0
    %40 = vmatpush.msra.mxu0 0.0
    %41 = vmatpush.msra.mxu0 0.0
    %42 = vmatpush.msra.mxu0 0.0
    %43 = vmatpush.msra.mxu0 0.0
    %44 = vmatpush.msra.mxu0 0.0
    %45 = vmatpush.msra.mxu0 0.0
    %46 = vmatpush.msra.mxu0 0.0
    %47 = vmatpush.msra.mxu0 0.0
    %48 = vmatpush.msra.mxu0 0.0
    %49 = vmatpush.msra.mxu0 0.0
    %50 = vmatpush.msra.mxu0 %v33
    %51 = vmatpush.msra.mxu0 %v32
    %52 = vmatpush.msra.mxu0 %v31
    %53 = vmatpush.msra.mxu0 %v30
    %54 = vmatmul.f32.gmra.mxu0 %v36
    %v55 = vpop.f32.mrf.mxu0
    %v56 = vadd.f32 0.0, %v55
    %57 = vdwg.mxu0
    %v58 = vld [vmem:[%s4] sm:$0xff]
    %v59 = vld [vmem:[%s4 + $0x8] sm:$0xff]
    %v60 = vld [vmem:[%s4 + $0x10] sm:$0xff]
    %v61 = vld [vmem:[%s4 + $0x18] sm:$0xff]
    %vm62 = vcmask 130048
    %63 = vst.msk [vmem:[%s7] sm:$0xff] %vm62, %v58
    %64 = vst.msk [vmem:[%s7 + $0x8] sm:$0xff] %vm62, %v59
    %65 = vst.msk [vmem:[%s7 + $0x10] sm:$0xff] %vm62, %v60
    %66 = vst.msk [vmem:[%s7 + $0x18] sm:$0xff] %vm62, %v61
    %v67 = vld [vmem:[%s5] sm:$0xff]
    %v68 = vld [vmem:[%s5 + $0x8] sm:$0xff]
    %v69 = vld [vmem:[%s5 + $0x10] sm:$0xff]
    %v70 = vld [vmem:[%s5 + $0x18] sm:$0xff]
    %71 = vst.msk [vmem:[%s8] sm:$0xff] %vm62, %v67
    %72 = vst.msk [vmem:[%s8 + $0x8] sm:$0xff] %vm62, %v68
    %73 = vst.msk [vmem:[%s8 + $0x10] sm:$0xff] %vm62, %v69
    %74 = vst.msk [vmem:[%s8 + $0x18] sm:$0xff] %vm62, %v70
    %v76 = vrot.slane %v56, 1
    %v77 = vperm.slane %v56, 0
    %v78 = vperm.slane %v76, 0
    %79 = vrot.lane.b32.xlu0 %v77, 96
    %v80 = vpop.permute.xlu0 %79
    %81 = vrot.lane.b32.xlu0 %v78, 96
    %v82 = vpop.permute.xlu0 %81
    %s85 = scalar_lea.vmem %s7, %s28
    %vm86 = vcmask 122880
    %87 = vst.msk [vmem:[%s85] sm:$0x1] %vm86, %v80
    %88 = vst.msk [vmem:[%s85 + $0x10] sm:$0x1] %vm86, %v82
    %89 = vrot.lane.b32.xlu0 %v77, 80
    %v90 = vpop.permute.xlu0 %89
    %91 = vrot.lane.b32.xlu0 %v78, 80
    %v92 = vpop.permute.xlu0 %91
    %s95 = scalar_lea.vmem %s8, %s28
    %96 = vst.msk [vmem:[%s95] sm:$0x1] %vm86, %v90
    %97 = vst.msk [vmem:[%s95 + $0x10] sm:$0x1] %vm86, %v92
    %v98 = vlaneseq
    %v99 = vand.u32 %v98, 127
    %v100 = vstv %s28
    %vm101 = vcmp.le.s32.totalorder %v99, %v100
    %v102 = vld [vmem:[%s7] sm:$0xff]
    %v103 = vld [vmem:[%s7 + $0x8] sm:$0xff]
    %v104 = vld [vmem:[%s8] sm:$0xff]
    %v105 = vld [vmem:[%s8 + $0x8] sm:$0xff]
    %v106 = vrot.slane %v56, 7
    %107 = vrot.lane.b32.xlu0 %v106, 120
    %v108 = vpop.permute.xlu0 %107
    %vm110 = vcmask 1040384
    %v111 = vsel %vm110, %v56, %v108
    %vm112 = vcmask 64512
    %v114 = vsel %vm112, %v111, 0
    %v117 = vsel %vm112, %v102, 0
    %v120 = vsel %vm112, %v103, 0
    %122 = vmatpush.xpose.msra.mxu0 0.0
    %123 = vmatpush.xpose.msra.mxu0 0.0
    %124 = vmatpush.xpose.msra.mxu0 0.0
    %125 = vmatpush.xpose.msra.mxu0 0.0
    %126 = vmatpush.xpose.msra.mxu0 0.0
    %127 = vmatpush.xpose.msra.mxu0 0.0
    %128 = vmatpush.xpose.msra.mxu0 0.0
    %129 = vmatpush.xpose.msra.mxu0 0.0
    %130 = vmatpush.xpose.msra.mxu0 0.0
    %131 = vmatpush.xpose.msra.mxu0 0.0
    %132 = vmatpush.xpose.msra.mxu0 0.0
    %133 = vmatpush.xpose.msra.mxu0 0.0
    %134 = vmatpush.xpose.msra.mxu0 0.0
    %135 = vmatpush.xpose.msra.mxu0 0.0
    %136 = vmatpush.xpose.msra.mxu0 %v120
    %137 = vmatpush.xpose.msra.mxu0 %v117
    %138 = vmatmul.f32.gmra.mxu0 %v114
    %v139 = vpop.f32.mrf.mxu0
    %v140 = vadd.f32 0.0, %v139
    %141 = vdwg.mxu0
    %v142 = vmul.f32 %v140, 0.35355338
    %v143 = vsel %vm101, %v142, -1e+30
    %vm144 = vcmask 123904
    %v145 = vsel %vm144, %v143, -inf
    %146 = vmax.xlane.f32.xlu0 %v145
    %v147 = vpop.xlane.xlu0 %146
    %v148 = vsub.f32 %v143, %v147
    %v149 = vmul.f32 %v148, 1.442695
    %v150 = vpow.pop %v149
    %v151 = vsel %vm144, %v150, 0.0
    %152 = vadd.xlane.f32.xlu0 %v151
    %v153 = vpop.xlane.xlu0 %152
    %v154 = vrcp.pop %v153
    %v155 = vmul.f32 %v153, %v154
    %v156 = vsub.f32 1.0, %v155
    %v157 = vmul.f32 %v154, %v156
    %v158 = vadd.f32 %v154, %v157
    %vm159 = vweird.f32 %v153
    %vm160 = vweird.f32 %v154
    %vm161 = vmor %vm159, %vm160
    %v162 = vsel %vm161, %v154, %v158
    %v163 = vand.u32 2147483647, %v153
    %vm164 = vcmp.eq.f32.partialorder %v163, 8.507059e+37
    %v165 = vand.u32 %v153, 2147483648
    %v166 = vor.u32 1.1754944e-38, %v165
    %v167 = vsel %vm164, %v166, %v162
    %v168 = vmul.f32 %v150, %v167
    %v170 = vsel %vm62, %v168, 0
    %172 = vmatpush.msra.mxu0 0.0
    %173 = vmatpush.msra.mxu0 0.0
    %174 = vmatpush.msra.mxu0 0.0
    %175 = vmatpush.msra.mxu0 0.0
    %176 = vmatpush.msra.mxu0 0.0
    %177 = vmatpush.msra.mxu0 0.0
    %178 = vmatpush.msra.mxu0 0.0
    %179 = vmatpush.msra.mxu0 0.0
    %180 = vmatpush.msra.mxu0 0.0
    %181 = vmatpush.msra.mxu0 0.0
    %182 = vmatpush.msra.mxu0 0.0
    %183 = vmatpush.msra.mxu0 0.0
    %184 = vmatpush.msra.mxu0 0.0
    %185 = vmatpush.msra.mxu0 0.0
    %186 = vmatpush.msra.mxu0 %v105
    %187 = vmatpush.msra.mxu0 %v104
    %188 = vmatmul.f32.gmra.mxu0 %v170
    %v189 = vpop.f32.mrf.mxu0
    %v190 = vadd.f32 0.0, %v189
    %191 = vdwg.mxu0
    %vm192 = vcmask 57344
    %193 = vst.msk [vmem:[#allocation2] sm:$0x1] %vm192, %v190
    %195 = vrot.lane.b32.xlu0 %v190, 8
    %v196 = vpop.permute.xlu0 %195
    %vm198 = vcmask 123969
    %199 = vst.msk [vmem:[#allocation2 - $0x1] sm:$0x2] %vm198, %v196
    %200 = vrot.lane.b32.xlu0 %v111, 112
    %v201 = vpop.permute.xlu0 %200
    %202 = vrot.lane.b32.xlu0 %v102, 120
    %v203 = vpop.permute.xlu0 %202
    %204 = vrot.lane.b32.xlu0 %v103, 120
    %v205 = vpop.permute.xlu0 %204
    %v206 = vsel %vm112, %v201, 0
    %v208 = vsel %vm112, %v203, 0
    %v210 = vsel %vm112, %v205, 0
    %212 = vmatpush.xpose.msra.mxu0 0.0
    %213 = vmatpush.xpose.msra.mxu0 0.0
    %214 = vmatpush.xpose.msra.mxu0 0.0
    %215 = vmatpush.xpose.msra.mxu0 0.0
    %216 = vmatpush.xpose.msra.mxu0 0.0
    %217 = vmatpush.xpose.msra.mxu0 0.0
    %218 = vmatpush.xpose.msra.mxu0 0.0
    %219 = vmatpush.xpose.msra.mxu0 0.0
    %220 = vmatpush.xpose.msra.mxu0 0.0
    %221 = vmatpush.xpose.msra.mxu0 0.0
    %222 = vmatpush.xpose.msra.mxu0 0.0
    %223 = vmatpush.xpose.msra.mxu0 0.0
    %224 = vmatpush.xpose.msra.mxu0 0.0
    %225 = vmatpush.xpose.msra.mxu0 0.0
    %226 = vmatpush.xpose.msra.mxu0 %v210
    %227 = vmatpush.xpose.msra.mxu0 %v208
    %228 = vmatmul.f32.gmra.mxu0 %v206
    %v229 = vpop.f32.mrf.mxu0
    %v230 = vadd.f32 0.0, %v229
    %231 = vdwg.mxu0
    %v232 = vmul.f32 %v230, 0.35355338
    %v233 = vsel %vm101, %v232, -1e+30
    %v234 = vsel %vm144, %v233, -inf
    %235 = vmax.xlane.f32.xlu0 %v234
    %v236 = vpop.xlane.xlu0 %235
    %v237 = vsub.f32 %v233, %v236
    %v238 = vmul.f32 %v237, 1.442695
    %v239 = vpow.pop %v238
    %v240 = vsel %vm144, %v239, 0.0
    %241 = vadd.xlane.f32.xlu0 %v240
    %v242 = vpop.xlane.xlu0 %241
    %v243 = vrcp.pop %v242
    %v244 = vmul.f32 %v242, %v243
    %v245 = vsub.f32 1.0, %v244
    %v246 = vmul.f32 %v243, %v245
    %v247 = vadd.f32 %v243, %v246
    %vm248 = vweird.f32 %v242
    %vm249 = vweird.f32 %v243
    %vm250 = vmor %vm248, %vm249
    %v251 = vsel %vm250, %v243, %v247
    %v252 = vand.u32 2147483647, %v242
    %vm253 = vcmp.eq.f32.partialorder %v252, 8.507059e+37
    %v254 = vand.u32 %v242, 2147483648
    %v255 = vor.u32 1.1754944e-38, %v254
    %v256 = vsel %vm253, %v255, %v251
    %v257 = vmul.f32 %v239, %v256
    %260 = vrot.lane.b32.xlu0 %v104, 120
    %v261 = vpop.permute.xlu0 %260
    %262 = vrot.lane.b32.xlu0 %v105, 120
    %v263 = vpop.permute.xlu0 %262
    %v267 = vsel %vm62, %v257, 0
    %269 = vmatpush.msra.mxu0 0.0
    %270 = vmatpush.msra.mxu0 0.0
    %271 = vmatpush.msra.mxu0 0.0
    %272 = vmatpush.msra.mxu0 0.0
    %273 = vmatpush.msra.mxu0 0.0
    %274 = vmatpush.msra.mxu0 0.0
    %275 = vmatpush.msra.mxu0 0.0
    %276 = vmatpush.msra.mxu0 0.0
    %277 = vmatpush.msra.mxu0 0.0
    %278 = vmatpush.msra.mxu0 0.0
    %279 = vmatpush.msra.mxu0 0.0
    %280 = vmatpush.msra.mxu0 0.0
    %281 = vmatpush.msra.mxu0 0.0
    %282 = vmatpush.msra.mxu0 0.0
    %283 = vmatpush.msra.mxu0 %v263
    %284 = vmatpush.msra.mxu0 %v261
    %285 = vmatmul.f32.gmra.mxu0 %v267
    %v286 = vpop.f32.mrf.mxu0
    %v287 = vadd.f32 0.0, %v286
    %288 = vdwg.mxu0
    %290 = vrot.lane.b32.xlu0 %v287, 16
    %v291 = vpop.permute.xlu0 %290
    %vm293 = vcmask 188544
    %294 = vst.msk [vmem:[#allocation2] sm:$0x1] %vm293, %v291
    %295 = vrot.lane.b32.xlu0 %v287, 24
    %v296 = vpop.permute.xlu0 %295
    %vm298 = vcmask 255169
    %299 = vst.msk [vmem:[#allocation2 - $0x1] sm:$0x2] %vm298, %v296
    %s300 = scalar_lea.vmem %s7, 16
    %v301 = vld [vmem:[%s300] sm:$0xff]
    %v302 = vld [vmem:[%s300 + $0x8] sm:$0xff]
    %s303 = scalar_lea.vmem %s8, 16
    %v304 = vld [vmem:[%s303] sm:$0xff]
    %v305 = vld [vmem:[%s303 + $0x8] sm:$0xff]
    %307 = vrot.lane.b32.xlu0 %v56, 120
    %v308 = vpop.permute.xlu0 %307
    %v310 = vsel %vm110, %v76, %v308
    %v312 = vsel %vm112, %v310, 0
    %v315 = vsel %vm112, %v301, 0
    %v318 = vsel %vm112, %v302, 0
    %320 = vmatpush.xpose.msra.mxu0 0.0
    %321 = vmatpush.xpose.msra.mxu0 0.0
    %322 = vmatpush.xpose.msra.mxu0 0.0
    %323 = vmatpush.xpose.msra.mxu0 0.0
    %324 = vmatpush.xpose.msra.mxu0 0.0
    %325 = vmatpush.xpose.msra.mxu0 0.0
    %326 = vmatpush.xpose.msra.mxu0 0.0
    %327 = vmatpush.xpose.msra.mxu0 0.0
    %328 = vmatpush.xpose.msra.mxu0 0.0
    %329 = vmatpush.xpose.msra.mxu0 0.0
    %330 = vmatpush.xpose.msra.mxu0 0.0
    %331 = vmatpush.xpose.msra.mxu0 0.0
    %332 = vmatpush.xpose.msra.mxu0 0.0
    %333 = vmatpush.xpose.msra.mxu0 0.0
    %334 = vmatpush.xpose.msra.mxu0 %v318
    %335 = vmatpush.xpose.msra.mxu0 %v315
    %336 = vmatmul.f32.gmra.mxu0 %v312
    %v337 = vpop.f32.mrf.mxu0
    %v338 = vadd.f32 0.0, %v337
    %339 = vdwg.mxu0
    %v340 = vmul.f32 %v338, 0.35355338
    %v341 = vsel %vm101, %v340, -1e+30
    %v342 = vsel %vm144, %v341, -inf
    %343 = vmax.xlane.f32.xlu0 %v342
    %v344 = vpop.xlane.xlu0 %343
    %v345 = vsub.f32 %v341, %v344
    %v346 = vmul.f32 %v345, 1.442695
    %v347 = vpow.pop %v346
    %v348 = vsel %vm144, %v347, 0.0
    %349 = vadd.xlane.f32.xlu0 %v348
    %v350 = vpop.xlane.xlu0 %349
    %v351 = vrcp.pop %v350
    %v352 = vmul.f32 %v350, %v351
    %v353 = vsub.f32 1.0, %v352
    %v354 = vmul.f32 %v351, %v353
    %v355 = vadd.f32 %v351, %v354
    %vm356 = vweird.f32 %v350
    %vm357 = vweird.f32 %v351
    %vm358 = vmor %vm356, %vm357
    %v359 = vsel %vm358, %v351, %v355
    %v360 = vand.u32 2147483647, %v350
    %vm361 = vcmp.eq.f32.partialorder %v360, 8.507059e+37
    %v362 = vand.u32 %v350, 2147483648
    %v363 = vor.u32 1.1754944e-38, %v362
    %v364 = vsel %vm361, %v363, %v359
    %v365 = vmul.f32 %v347, %v364
    %v367 = vsel %vm62, %v365, 0
    %369 = vmatpush.msra.mxu0 0.0
    %370 = vmatpush.msra.mxu0 0.0
    %371 = vmatpush.msra.mxu0 0.0
    %372 = vmatpush.msra.mxu0 0.0
    %373 = vmatpush.msra.mxu0 0.0
    %374 = vmatpush.msra.mxu0 0.0
    %375 = vmatpush.msra.mxu0 0.0
    %376 = vmatpush.msra.mxu0 0.0
    %377 = vmatpush.msra.mxu0 0.0
    %378 = vmatpush.msra.mxu0 0.0
    %379 = vmatpush.msra.mxu0 0.0
    %380 = vmatpush.msra.mxu0 0.0
    %381 = vmatpush.msra.mxu0 0.0
    %382 = vmatpush.msra.mxu0 0.0
    %383 = vmatpush.msra.mxu0 %v305
    %384 = vmatpush.msra.mxu0 %v304
    %385 = vmatmul.f32.gmra.mxu0 %v367
    %v386 = vpop.f32.mrf.mxu0
    %v387 = vadd.f32 0.0, %v386
    %388 = vdwg.mxu0
    %389 = vst.msk [vmem:[#allocation2 + $0x1] sm:$0x1] %vm192, %v387
    %391 = vrot.lane.b32.xlu0 %v387, 8
    %v392 = vpop.permute.xlu0 %391
    %394 = vst.msk [vmem:[#allocation2] sm:$0x2] %vm198, %v392
    %395 = vrot.lane.b32.xlu0 %v310, 112
    %v396 = vpop.permute.xlu0 %395
    %397 = vrot.lane.b32.xlu0 %v301, 120
    %v398 = vpop.permute.xlu0 %397
    %399 = vrot.lane.b32.xlu0 %v302, 120
    %v400 = vpop.permute.xlu0 %399
    %v401 = vsel %vm112, %v396, 0
    %v403 = vsel %vm112, %v398, 0
    %v405 = vsel %vm112, %v400, 0
    %407 = vmatpush.xpose.msra.mxu0 0.0
    %408 = vmatpush.xpose.msra.mxu0 0.0
    %409 = vmatpush.xpose.msra.mxu0 0.0
    %410 = vmatpush.xpose.msra.mxu0 0.0
    %411 = vmatpush.xpose.msra.mxu0 0.0
    %412 = vmatpush.xpose.msra.mxu0 0.0
    %413 = vmatpush.xpose.msra.mxu0 0.0
    %414 = vmatpush.xpose.msra.mxu0 0.0
    %415 = vmatpush.xpose.msra.mxu0 0.0
    %416 = vmatpush.xpose.msra.mxu0 0.0
    %417 = vmatpush.xpose.msra.mxu0 0.0
    %418 = vmatpush.xpose.msra.mxu0 0.0
    %419 = vmatpush.xpose.msra.mxu0 0.0
    %420 = vmatpush.xpose.msra.mxu0 0.0
    %421 = vmatpush.xpose.msra.mxu0 %v405
    %422 = vmatpush.xpose.msra.mxu0 %v403
    %423 = vmatmul.f32.gmra.mxu0 %v401
    %v424 = vpop.f32.mrf.mxu0
    %v425 = vadd.f32 0.0, %v424
    %426 = vdwg.mxu0
    %v427 = vmul.f32 %v425, 0.35355338
    %v428 = vsel %vm101, %v427, -1e+30
    %v429 = vsel %vm144, %v428, -inf
    %430 = vmax.xlane.f32.xlu0 %v429
    %v431 = vpop.xlane.xlu0 %430
    %v432 = vsub.f32 %v428, %v431
    %v433 = vmul.f32 %v432, 1.442695
    %v434 = vpow.pop %v433
    %v435 = vsel %vm144, %v434, 0.0
    %436 = vadd.xlane.f32.xlu0 %v435
    %v437 = vpop.xlane.xlu0 %436
    %v438 = vrcp.pop %v437
    %v439 = vmul.f32 %v437, %v438
    %v440 = vsub.f32 1.0, %v439
    %v441 = vmul.f32 %v438, %v440
    %v442 = vadd.f32 %v438, %v441
    %vm443 = vweird.f32 %v437
    %vm444 = vweird.f32 %v438
    %vm445 = vmor %vm443, %vm444
    %v446 = vsel %vm445, %v438, %v442
    %v447 = vand.u32 2147483647, %v437
    %vm448 = vcmp.eq.f32.partialorder %v447, 8.507059e+37
    %v449 = vand.u32 %v437, 2147483648
    %v450 = vor.u32 1.1754944e-38, %v449
    %v451 = vsel %vm448, %v450, %v446
    %v452 = vmul.f32 %v434, %v451
    %455 = vrot.lane.b32.xlu0 %v304, 120
    %v456 = vpop.permute.xlu0 %455
    %457 = vrot.lane.b32.xlu0 %v305, 120
    %v458 = vpop.permute.xlu0 %457
    %v462 = vsel %vm62, %v452, 0
    %464 = vmatpush.msra.mxu0 0.0
    %465 = vmatpush.msra.mxu0 0.0
    %466 = vmatpush.msra.mxu0 0.0
    %467 = vmatpush.msra.mxu0 0.0
    %468 = vmatpush.msra.mxu0 0.0
    %469 = vmatpush.msra.mxu0 0.0
    %470 = vmatpush.msra.mxu0 0.0
    %471 = vmatpush.msra.mxu0 0.0
    %472 = vmatpush.msra.mxu0 0.0
    %473 = vmatpush.msra.mxu0 0.0
    %474 = vmatpush.msra.mxu0 0.0
    %475 = vmatpush.msra.mxu0 0.0
    %476 = vmatpush.msra.mxu0 0.0
    %477 = vmatpush.msra.mxu0 0.0
    %478 = vmatpush.msra.mxu0 %v458
    %479 = vmatpush.msra.mxu0 %v456
    %480 = vmatmul.f32.gmra.mxu0 %v462
    %v481 = vpop.f32.mrf.mxu0
    %v482 = vadd.f32 0.0, %v481
    %483 = vdwg.mxu0
    %485 = vrot.lane.b32.xlu0 %v482, 16
    %v486 = vpop.permute.xlu0 %485
    %488 = vst.msk [vmem:[#allocation2 + $0x1] sm:$0x1] %vm293, %v486
    %489 = vrot.lane.b32.xlu0 %v482, 24
    %v490 = vpop.permute.xlu0 %489
    %492 = vst.msk [vmem:[#allocation2] sm:$0x2] %vm298, %v490
    %v493 = vld [vmem:[#allocation2] sm:$0x3]
    %v494 = vld [vmem:[%s3] sm:$0xff]
    %v495 = vld [vmem:[%s3 + $0x8] sm:$0xff]
    %v496 = vld [vmem:[%s3 + $0x10] sm:$0xff]
    %v497 = vld [vmem:[%s3 + $0x18] sm:$0xff]
    %v499 = vsel %vm34, %v493, 0
    %501 = vmatpush.msra.mxu0 0.0
    %502 = vmatpush.msra.mxu0 0.0
    %503 = vmatpush.msra.mxu0 0.0
    %504 = vmatpush.msra.mxu0 0.0
    %505 = vmatpush.msra.mxu0 0.0
    %506 = vmatpush.msra.mxu0 0.0
    %507 = vmatpush.msra.mxu0 0.0
    %508 = vmatpush.msra.mxu0 0.0
    %509 = vmatpush.msra.mxu0 0.0
    %510 = vmatpush.msra.mxu0 0.0
    %511 = vmatpush.msra.mxu0 0.0
    %512 = vmatpush.msra.mxu0 0.0
    %513 = vmatpush.msra.mxu0 %v497
    %514 = vmatpush.msra.mxu0 %v496
    %515 = vmatpush.msra.mxu0 %v495
    %516 = vmatpush.msra.mxu0 %v494
    %517 = vmatmul.f32.gmra.mxu0 %v499
    %v518 = vpop.f32.mrf.mxu0
    %v519 = vadd.f32 0.0, %v518
    %520 = vdwg.mxu0
    %vm521 = vcmask 254976
    %522 = vst.msk [vmem:[#allocation4] sm:$0x3] %vm521, %v519
    // Predicated region
    $region26: #{self_attention_forward.1} parent=1 // pred_check
      _
    $region27: #{self_attention_forward.1} parent=1 // pred_check_branch
      %524 = sbr.rel (0) target = $region29
    $region28: #{self_attention_forward.1} parent=1 // pred_region
      %526 = vsyncadd [#allocation5], 0
      %s528 = sshll.u32 [#allocation4], 4
      %s529 = int_to_ptr.vmem [resolvable:$true] %s528
      %s530 = sshll.u32 %s6, 4
      %s531 = int_to_ptr.hbm [resolvable:$true] %s530
      %533 = dma.vmem_to_hbm [thread:$0]  %s529, 32, %s531, [#allocation5]
    $region29: #{self_attention_forward.1} parent=1 // pred_fallthru
      _
    // Predicated region
    $region30: #{self_attention_forward.1} parent=1 // pred_check
      _
    $region31: #{self_attention_forward.1} parent=1 // pred_check_branch
      %535 = sbr.rel (0) target = $region33
    $region32: #{self_attention_forward.1} parent=1 // pred_region
      _
    $region33: #{self_attention_forward.1} parent=1 // pred_fallthru
      _
    // Predicated region
    $region34: #{self_attention_forward.1} parent=1 // pred_check
      _
    $region35: #{self_attention_forward.1} parent=1 // pred_check_branch
      %537 = sbr.rel (0) target = $region37
    $region36: #{self_attention_forward.1} parent=1 // pred_region
      _
    $region37: #{self_attention_forward.1} parent=1 // pred_fallthru
      _
    // Predicated region
    $region38: #{self_attention_forward.1} parent=1 // pred_check
      _
    $region39: #{self_attention_forward.1} parent=1 // pred_check_branch
      %539 = sbr.rel (0) target = $region41
    $region40: #{self_attention_forward.1} parent=1 // pred_region
      %541 = dma.done [#allocation5], 32
    $region41: #{self_attention_forward.1} parent=1 // pred_fallthru
      _
    // Predicated region
    $region42: #{self_attention_forward.1} parent=1 // pred_check
      _
    $region43: #{self_attention_forward.1} parent=1 // pred_check_branch
      %543 = sbr.rel (0) target = $region45
    $region44: #{self_attention_forward.1} parent=1 // pred_region
      _
    $region45: #{self_attention_forward.1} parent=1 // pred_fallthru
      _
    // Predicated region
    $region46: #{self_attention_forward.1} parent=1 // pred_check
      _
    $region47: #{self_attention_forward.1} parent=1 // pred_check_branch
      %545 = sbr.rel (0) target = $region49
    $region48: #{self_attention_forward.1} parent=1 // pred_region
      _
    $region49: #{self_attention_forward.1} parent=1 // pred_fallthru
      _
    %546 = vsyncpa [#allocation5], 1

</llo_original>
